<compile_context>
chip_gen: v7x
topology: tpu7x:2x2x1
jax: 0.10.0
libtpu: 0.0.40
codegen_flags: <defaults>
</compile_context>

<pallas_src>
import functools

import jax
import jax.numpy as jnp
from jax.experimental import pallas as pl
from jax.experimental.pallas import tpu as pltpu

EPS = 1e-5


def _bn_kernel(x_ref, gamma_ref, beta_ref, o_ref, *, tile_c):
    # x_ref: (N, TILE_C, HW) f32 (current channel tile).
    # gamma_ref / beta_ref: (1, C, 1) f32 — constant block index, DMA'd once;
    # slice the current channel tile in-kernel (sublane offset is a multiple of
    # tile_c, hence of 8, so the dynamic slice stays aligned).
    c0 = pl.multiple_of(pl.program_id(0) * tile_c, tile_c)
    gamma = gamma_ref[:, pl.ds(c0, tile_c), :]            # (1, TC, 1)
    beta = beta_ref[:, pl.ds(c0, tile_c), :]               # (1, TC, 1)

    x = x_ref[...]
    n, _, hw = x.shape
    inv_count = 1.0 / (n * hw)

    # Pass 1: per-channel mean (lane-axis reduce on the XLU).
    s1 = jnp.sum(x, axis=2, keepdims=True)                  # (N, TC, 1)
    if n > 1:                                               # static; no-op for N == 1
        s1 = jnp.sum(s1, axis=0, keepdims=True)             # (1, TC, 1)
    mean = s1 * inv_count

    # Pass 2: centered variance (numerically robust; x is already in VMEM so
    # the extra elementwise work is hidden under HBM time).
    xc = x - mean                                           # (N, TC, HW)
    s2 = jnp.sum(xc * xc, axis=2, keepdims=True)            # (N, TC, 1)
    if n > 1:
        s2 = jnp.sum(s2, axis=0, keepdims=True)
    var = s2 * inv_count                                    # biased variance (training-mode BN)
    inv_std = jax.lax.rsqrt(var + EPS)                      # EUP

    scale = inv_std * gamma                                 # (1, TC, 1)
    o_ref[...] = (xc * scale + beta).astype(o_ref.dtype)


def _pick_tile_c(n, c, hw, itemsize=4, budget_bytes=12 * 1024 * 1024):
    """Pick the channel tile.

    Policy (per perf review): among divisors of C that are multiples of 8 (or C
    itself) whose double-buffered in+out tiles fit `budget_bytes`, prefer the
    largest tile whose step count is EVEN and >= 2 (so v7x megacore gets an even
    split), then any multi-step tile, then a single-step tile.  If nothing fits,
    error out instead of silently compiling a VMEM-overflowing block.
    """
    cands = [d for d in range(c, 0, -1) if c % d == 0 and (d % 8 == 0 or d == c)]
    # 4x = (in + out) * double-buffer.
    fits = [d for d in cands if 4 * n * d * hw * itemsize <= budget_bytes]
    if not fits:
        # TODO(synk): for very large N*HW, switch to a spatial grid axis with
        # per-channel s1/s2 accumulators instead of covering all of N*HW per tile.
        raise ValueError(
            f"BatchNorm tile for N={n}, C={c}, HW={hw} does not fit the "
            f"{budget_bytes} byte VMEM budget; a spatial-grid variant is required."
        )
    even = [d for d in fits if (c // d) >= 2 and (c // d) % 2 == 0]
    if even:
        return even[0]
    multi = [d for d in fits if c // d >= 2]
    return multi[0] if multi else fits[0]


def batchnorm2d_pallas(x_nchw, gamma, beta):
    """Training-mode BatchNorm2d forward. x_nchw: (N, C, H, W) f32; gamma, beta: (C,)."""
    N, C, H, W = x_nchw.shape
    HW = H * W

    # Native-layout views only (no transposes, no copies).
    x3d = x_nchw.reshape(N, C, HW)
    g3d = gamma.reshape(1, C, 1).astype(jnp.float32)
    b3d = beta.reshape(1, C, 1).astype(jnp.float32)

    tile_c = _pick_tile_c(N, C, HW, itemsize=x3d.dtype.itemsize)
    grid = (C // tile_c,)

    itemsize = x3d.dtype.itemsize
    cost = pl.CostEstimate(
        flops=5 * N * C * HW,                       # ~2 reduce + 3 elementwise per element
        transcendentals=C,                          # one rsqrt per channel
        bytes_accessed=2 * N * C * HW * itemsize + 2 * C * 4,
    )

    y3d = pl.pallas_call(
        functools.partial(_bn_kernel, tile_c=tile_c),
        out_shape=jax.ShapeDtypeStruct((N, C, HW), x3d.dtype),
        grid=grid,
        in_specs=[
            pl.BlockSpec((N, tile_c, HW), lambda c: (0, c, 0)),
            pl.BlockSpec((1, C, 1), lambda c: (0, 0, 0)),   # fetched once (constant block index)
            pl.BlockSpec((1, C, 1), lambda c: (0, 0, 0)),   # fetched once
        ],
        out_specs=pl.BlockSpec((N, tile_c, HW), lambda c: (0, c, 0)),
        compiler_params=pltpu.CompilerParams(
            dimension_semantics=("parallel",),
            vmem_limit_bytes=32 * 1024 * 1024,
        ),
        cost_estimate=cost,
    )(x3d, g3d, b3d)

    # TODO(synk): running_mean/running_var update (momentum=0.1, unbiased var) of
    # track_running_stats is not emitted; it does not affect the forward output.
    return y3d.reshape(N, C, H, W)


if __name__ == "__main__":
    key = jax.random.PRNGKey(0)
    kx, kg, kb = jax.random.split(key, 3)

    N, C, H, W = 1, 240, 28, 28  # matches BatchNorm2d(240) and the reference input
    x = jax.random.normal(kx, (N, C, H, W), dtype=jnp.float32)
    # Randomized affine params to exercise the affine path (PyTorch default is ones/zeros).
    gamma = 1.0 + 0.1 * jax.random.normal(kg, (C,), dtype=jnp.float32)
    beta = 0.1 * jax.random.normal(kb, (C,), dtype=jnp.float32)

    y = batchnorm2d_pallas(x, gamma, beta)
    y = jax.block_until_ready(y)

    # Pure-JAX reference (training-mode BN: batch stats, biased variance).
    mean = jnp.mean(x, axis=(0, 2, 3), keepdims=True)
    var = jnp.mean((x - mean) ** 2, axis=(0, 2, 3), keepdims=True)
    y_ref = (x - mean) / jnp.sqrt(var + EPS) * gamma[None, :, None, None] \
        + beta[None, :, None, None]

    assert y.shape == (N, C, H, W) and y.dtype == jnp.float32
    assert jnp.allclose(y, y_ref, atol=1e-4, rtol=1e-4), "mismatch vs reference"
    print("KERNEL_OK")
</pallas_src>

<mosaic_0001>
module attributes {stable_mosaic.version = 11 : i64} {
  func.func @_bn_kernel(%arg0: i32, %arg1: memref<1x120x784xf32, #tpu.memory_space<vmem>>, %arg2: memref<1x240x1xf32, #tpu.memory_space<vmem>>, %arg3: memref<1x240x1xf32, #tpu.memory_space<vmem>>, %arg4: memref<1x120x784xf32, #tpu.memory_space<vmem>>) attributes {dimension_semantics = [#tpu.dimension_semantics<parallel>], iteration_bounds = array<i64: 2>, scalar_prefetch = 0 : i64, scratch_operands = 0 : i64, tpu.core_type = #tpu.core_type<tc>, window_params = [{transform_indices = @transform_0, window_bounds = array<i64: 1, 120, 784>}, {pipeline_mode = #tpu.pipeline_mode<synchronous>, transform_indices = @transform_1, window_bounds = array<i64: 1, 240, 1>}, {pipeline_mode = #tpu.pipeline_mode<synchronous>, transform_indices = @transform_2, window_bounds = array<i64: 1, 240, 1>}, {transform_indices = @transform_3, window_bounds = array<i64: 1, 120, 784>}]} {
    %c120_i32 = arith.constant 120 : i32
    %0 = arith.muli %arg0, %c120_i32 : i32
    %1 = tpu.assume_multiple %0, 120 : i32
    %c0 = arith.constant 0 : index
    %2 = arith.index_cast %1 : i32 to index
    %c0_0 = arith.constant 0 : index
    %3 = vector.load %arg2[%c0, %2, %c0_0] : memref<1x240x1xf32, #tpu.memory_space<vmem>>, vector<1x120x1xf32>
    %c0_1 = arith.constant 0 : index
    %4 = arith.index_cast %1 : i32 to index
    %c0_2 = arith.constant 0 : index
    %5 = vector.load %arg3[%c0_1, %4, %c0_2] : memref<1x240x1xf32, #tpu.memory_space<vmem>>, vector<1x120x1xf32>
    %c0_3 = arith.constant 0 : index
    %c0_4 = arith.constant 0 : index
    %c0_5 = arith.constant 0 : index
    %6 = vector.load %arg1[%c0_3, %c0_4, %c0_5] : memref<1x120x784xf32, #tpu.memory_space<vmem>>, vector<1x120x784xf32>
    %cst = arith.constant dense<0.000000e+00> : vector<1x120xf32>
    %7 = vector.multi_reduction <add>, %6, %cst [2] : vector<1x120x784xf32> to vector<1x120xf32>
    %8 = vector.shape_cast %7 : vector<1x120xf32> to vector<1x120x1xf32>
    %cst_6 = arith.constant 0.00127551018 : f32
    %9 = vector.broadcast %cst_6 : f32 to vector<1x120x1xf32>
    %10 = arith.mulf %8, %9 : vector<1x120x1xf32>
    %11 = vector.broadcast %10 : vector<1x120x1xf32> to vector<1x120x784xf32>
    %12 = arith.subf %6, %11 : vector<1x120x784xf32>
    %13 = arith.mulf %12, %12 : vector<1x120x784xf32>
    %cst_7 = arith.constant dense<0.000000e+00> : vector<1x120xf32>
    %14 = vector.multi_reduction <add>, %13, %cst_7 [2] : vector<1x120x784xf32> to vector<1x120xf32>
    %15 = vector.shape_cast %14 : vector<1x120xf32> to vector<1x120x1xf32>
    %cst_8 = arith.constant 0.00127551018 : f32
    %16 = vector.broadcast %cst_8 : f32 to vector<1x120x1xf32>
    %17 = arith.mulf %15, %16 : vector<1x120x1xf32>
    %cst_9 = arith.constant 9.99999974E-6 : f32
    %18 = vector.broadcast %cst_9 : f32 to vector<1x120x1xf32>
    %19 = arith.addf %17, %18 : vector<1x120x1xf32>
    %20 = math.rsqrt %19 : vector<1x120x1xf32>
    %21 = arith.mulf %20, %3 : vector<1x120x1xf32>
    %22 = vector.broadcast %21 : vector<1x120x1xf32> to vector<1x120x784xf32>
    %23 = arith.mulf %12, %22 : vector<1x120x784xf32>
    %24 = vector.broadcast %5 : vector<1x120x1xf32> to vector<1x120x784xf32>
    %25 = arith.addf %23, %24 : vector<1x120x784xf32>
    %c0_10 = arith.constant 0 : index
    %c0_11 = arith.constant 0 : index
    %c0_12 = arith.constant 0 : index
    %26 = vector.load %arg4[%c0_10, %c0_11, %c0_12] : memref<1x120x784xf32, #tpu.memory_space<vmem>>, vector<1x120x784xf32>
    tpu.vector_store %arg4[%c0_10, %c0_11, %c0_12], %25 {strides = array<i32>} : memref<1x120x784xf32, #tpu.memory_space<vmem>>, vector<1x120x784xf32>,
    return
  }
  func.func @transform_0(%arg0: i32) -> (i32, i32, i32) {
    %c0_i32 = arith.constant 0 : i32
    %c0_i32_0 = arith.constant 0 : i32
    %c0_i32_1 = arith.constant 0 : i32
    return %c0_i32, %arg0, %c0_i32_0 : i32, i32, i32
  }
  func.func @transform_1(%arg0: i32) -> (i32, i32, i32) {
    %c0_i32 = arith.constant 0 : i32
    %c0_i32_0 = arith.constant 0 : i32
    %c0_i32_1 = arith.constant 0 : i32
    %c0_i32_2 = arith.constant 0 : i32
    return %c0_i32, %c0_i32_0, %c0_i32_1 : i32, i32, i32
  }
  func.func @transform_2(%arg0: i32) -> (i32, i32, i32) {
    %c0_i32 = arith.constant 0 : i32
    %c0_i32_0 = arith.constant 0 : i32
    %c0_i32_1 = arith.constant 0 : i32
    %c0_i32_2 = arith.constant 0 : i32
    return %c0_i32, %c0_i32_0, %c0_i32_1 : i32, i32, i32
  }
  func.func @transform_3(%arg0: i32) -> (i32, i32, i32) {
    %c0_i32 = arith.constant 0 : i32
    %c0_i32_0 = arith.constant 0 : i32
    %c0_i32_1 = arith.constant 0 : i32
    return %c0_i32, %arg0, %c0_i32_0 : i32, i32, i32
  }
}

</mosaic_0001>

<llo_original>
// kernel: tpu_custom_call.1
$region0: #{tpu_custom_call.1}
  #allocation0 [shape = 'u32[]', space=smem, size = 0x4, offset = 0x4, fixed_abs, tag = 'smem constant byte address 0x4 - core index']
  #allocation1 [shape = 'u32[144,128]{1,0:T(1,128)}', space=vmem, size = 0x12000, scoped, tag = 'internal scratch']
  %s0 = inlined_call_operand.vmem [shape: f32[1,240,784], index: 0, kind: input, shape index: {}]
  %s1 = inlined_call_operand.vmem [shape: f32[1,240,1], index: 1, kind: input, shape index: {}]
  %s2 = inlined_call_operand.vmem [shape: f32[1,240,1], index: 2, kind: input, shape index: {}]
  %s3 = inlined_call_operand.vmem [shape: f32[1,240,784], index: 3, kind: output, shape index: {}]
  %s4 = sld [smem:[#allocation0]]
  $region45: #{tpu_custom_call.1} parent=0
    _
  %s6 = ssub.s32 1, %s4
  %s7 = scalar_select 0, %s6, %s4
  loop: start=0, step=1, limit=4
  $region2: #{tpu_custom_call.1} parent=0 // loop_pre_header
    _
  $region3: #{tpu_custom_call.1} parent=0 // loop_header
    %s9 = sphi 0, %s13
    %p10 = scmp.ge.s32.totalorder %s9, 4
    %s19 = sphi 0, %s21
    %s22 = sphi 0, %s19
    %s23 = sphi 0, %s22
    %s39 = sphi 0, %s23
    %s43 = sphi 0, %s43
    %s45 = sphi 0, %s43
    %s46 = sphi 0, %s45
    %s60 = sphi 0, %s46
    %s64 = sphi 0, %s64
    %s66 = sphi 0, %s64
    %s67 = sphi 0, %s66
    %s81 = sphi 0, %s67
    %s87 = sphi 0, %s89
    %s90 = sphi 0, %s87
    %s91 = sphi 0, %s90
    %s107 = sphi 0, %s91
  $region4: #{tpu_custom_call.1} parent=0 // loop_header_branch
    %12 = sbr.rel (%p10) target = $region8
  $region5: #{tpu_custom_call.1} parent=0 // loop_body
    %s14 = ssub.s32 %s9, 1
    %s15 = ssub.s32 %s9, 2
    %s16 = sadd.s32 %s9, 1
    %s17 = ssub.s32 %s9, %s16
    %p18 = scmp.eq.s32.totalorder %s17, 0
    %s20 = sadd.s32 %s19, 1
    %s21 = scalar_select %p18, %s19, %s20
    %p24 = pneg %p18
    %p25 = scmp.eq.s32.totalorder %s9, 1
    %p26 = por %p24, %p25
    %p27 = scmp.ne.s32.totalorder %s19, %s22
    %p28 = scmp.eq.s32.totalorder %s9, 0
    %p29 = por %p27, %p28
    %p30 = scmp.ne.s32.totalorder %s19, %s22
    %p31 = scmp.eq.s32.totalorder %s14, 1
    %p32 = por %p30, %p31
    %p33 = scmp.ne.s32.totalorder %s22, %s23
    %p34 = scmp.eq.s32.totalorder %s14, 0
    %p35 = por %p33, %p34
    %p36 = scmp.ne.s32.totalorder %s22, %s23
    %p37 = scmp.eq.s32.totalorder %s15, 1
    %p38 = por %p36, %p37
    %p40 = scmp.ne.s32.totalorder %s23, %s39
    %p41 = scmp.eq.s32.totalorder %s15, 0
    %p42 = por %p40, %p41
    %s44 = sadd.s32 %s43, 1
    %p47 = scmp.eq.s32.totalorder %s9, 1
    %p48 = scmp.ne.s32.totalorder %s43, %s45
    %p49 = scmp.eq.s32.totalorder %s9, 0
    %p50 = por %p48, %p49
    %p51 = scmp.ne.s32.totalorder %s43, %s45
    %p52 = scmp.eq.s32.totalorder %s14, 1
    %p53 = por %p51, %p52
    %p54 = scmp.ne.s32.totalorder %s45, %s46
    %p55 = scmp.eq.s32.totalorder %s14, 0
    %p56 = por %p54, %p55
    %p57 = scmp.ne.s32.totalorder %s45, %s46
    %p58 = scmp.eq.s32.totalorder %s15, 1
    %p59 = por %p57, %p58
    %p61 = scmp.ne.s32.totalorder %s46, %s60
    %p62 = scmp.eq.s32.totalorder %s15, 0
    %p63 = por %p61, %p62
    %s65 = sadd.s32 %s64, 1
    %p68 = scmp.eq.s32.totalorder %s9, 1
    %p69 = scmp.ne.s32.totalorder %s64, %s66
    %p70 = scmp.eq.s32.totalorder %s9, 0
    %p71 = por %p69, %p70
    %p72 = scmp.ne.s32.totalorder %s64, %s66
    %p73 = scmp.eq.s32.totalorder %s14, 1
    %p74 = por %p72, %p73
    %p75 = scmp.ne.s32.totalorder %s66, %s67
    %p76 = scmp.eq.s32.totalorder %s14, 0
    %p77 = por %p75, %p76
    %p78 = scmp.ne.s32.totalorder %s66, %s67
    %p79 = scmp.eq.s32.totalorder %s15, 1
    %p80 = por %p78, %p79
    %p82 = scmp.ne.s32.totalorder %s67, %s81
    %p83 = scmp.eq.s32.totalorder %s15, 0
    %p84 = por %p82, %p83
    %s85 = ssub.s32 %s9, %s16
    %p86 = scmp.eq.s32.totalorder %s85, 0
    %s88 = sadd.s32 %s87, 1
    %s89 = scalar_select %p86, %s87, %s88
    %p92 = pneg %p86
    %p93 = scmp.eq.s32.totalorder %s9, 1
    %p94 = por %p92, %p93
    %p95 = scmp.ne.s32.totalorder %s87, %s90
    %p96 = scmp.eq.s32.totalorder %s9, 0
    %p97 = por %p95, %p96
    %p98 = scmp.ne.s32.totalorder %s87, %s90
    %p99 = scmp.eq.s32.totalorder %s14, 1
    %p100 = por %p98, %p99
    %p101 = scmp.ne.s32.totalorder %s90, %s91
    %p102 = scmp.eq.s32.totalorder %s14, 0
    %p103 = por %p101, %p102
    %p104 = scmp.ne.s32.totalorder %s90, %s91
    %p105 = scmp.eq.s32.totalorder %s15, 1
    %p106 = por %p104, %p105
    %p108 = scmp.ne.s32.totalorder %s91, %s107
    %p109 = scmp.eq.s32.totalorder %s15, 0
    %p110 = por %p108, %p109
    %p111 = scmp.le.s32.totalorder 1, %s9
    %p112 = scmp.lt.s32.totalorder %s9, 3
    %p113 = pnand %p111, %p112
    %p114 = pneg %p113
    // Predicated region
    $region9: #{tpu_custom_call.1} parent=5 // pred_check
      _
    $region10: #{tpu_custom_call.1} parent=5 // pred_check_branch
      %116 = sbr.rel (%p113) target = $region12
    $region11: #{tpu_custom_call.1} parent=5 // pred_region
      %s117 = ssub.s32 %s9, 1
      // Predicated region
      $region13: #{tpu_custom_call.1} parent=11 // pred_check
        %p118 = pneg %p56
      $region14: #{tpu_custom_call.1} parent=11 // pred_check_branch
        %120 = sbr.rel (%p118) target = $region16
      $region15: #{tpu_custom_call.1} parent=11 // pred_region
        _
      $region16: #{tpu_custom_call.1} parent=11 // pred_fallthru
        _
      // Predicated region
      $region17: #{tpu_custom_call.1} parent=11 // pred_check
        %p121 = pneg %p77
      $region18: #{tpu_custom_call.1} parent=11 // pred_check_branch
        %123 = sbr.rel (%p121) target = $region20
      $region19: #{tpu_custom_call.1} parent=11 // pred_region
        _
      $region20: #{tpu_custom_call.1} parent=11 // pred_fallthru
        _
    $region12: #{tpu_custom_call.1} parent=5 // pred_fallthru
      _
    %p124 = scmp.lt.s32.totalorder %s9, 2
    // Predicated region
    $region21: #{tpu_custom_call.1} parent=5 // pred_check
      %p125 = pneg %p124
    $region22: #{tpu_custom_call.1} parent=5 // pred_check_branch
      %127 = sbr.rel (%p125) target = $region24
    $region23: #{tpu_custom_call.1} parent=5 // pred_region
      // Predicated region
      $region25: #{tpu_custom_call.1} parent=23 // pred_check
        %p128 = pneg %p29
      $region26: #{tpu_custom_call.1} parent=23 // pred_check_branch
        %130 = sbr.rel (%p128) target = $region28
      $region27: #{tpu_custom_call.1} parent=23 // pred_region
        %s131 = smul.u32 15, %s9
        %p132 = scmp.lt.s32.totalorder %s131, 29
        %s133 = scalar_select %p132, %s131, 29
        %s134 = smul.addr %s133, 7
        %s135 = smul.addr %s134, 8
        %s136 = scalar_lea.vmem %s0, %s135
        %s137 = smul.u32 15, %s9
      $region28: #{tpu_custom_call.1} parent=23 // pred_fallthru
        _
    $region24: #{tpu_custom_call.1} parent=5 // pred_fallthru
      _
    %p138 = scmp.le.s32.totalorder 1, %s9
    %p139 = scmp.lt.s32.totalorder %s9, 3
    %p140 = pnand %p138, %p139
    %p141 = pneg %p140
    // Predicated region
    $region29: #{tpu_custom_call.1} parent=5 // pred_check
      _
    $region30: #{tpu_custom_call.1} parent=5 // pred_check_branch
      %143 = sbr.rel (%p140) target = $region32
    $region31: #{tpu_custom_call.1} parent=5 // pred_region
      %s144 = ssub.s32 %s9, 1
      %s145 = smul.u32 15, %s14
      %p146 = scmp.lt.s32.totalorder %s145, 29
      %s147 = scalar_select %p146, %s145, 29
      %s148 = smul.addr %s147, 7
      %s149 = smul.addr %s148, 8
      %s150 = scalar_lea.vmem %s0, %s149
      %p151 = pneg %p35
      %p152 = pneg %p32
      %p153 = pneg %p56
      %p154 = pneg %p53
      %p155 = pneg %p77
      %p156 = pneg %p74
      %p157 = pneg %p103
      %p158 = pneg %p100
      %s159 = smul.u32 15, %s14
      %p160 = scmp.lt.s32.totalorder %s159, 29
      %s161 = scalar_select %p160, %s159, 29
      %s162 = smul.addr %s161, 7
      %s163 = smul.addr %s162, 8
      %s164 = scalar_lea.vmem %s3, %s163
      %s165 = smul.u32 15, %s14
      %p166 = scmp.lt.s32.totalorder %s165, 29
      %s167 = scalar_select %p166, %s165, 29
      %s168 = smul.addr %s167, 7
      %s169 = smul.addr %s168, 8
      %s170 = scalar_lea.vmem %s0, %s169
      %s171 = smul.u32 15, %s14
      %s172 = smul.u32 15, %s14
      %p173 = scmp.lt.s32.totalorder %s172, 29
      %s174 = scalar_select %p173, %s172, 29
      %s175 = smul.addr %s174, 7
      %s176 = smul.addr %s175, 8
      %s177 = scalar_lea.vmem %s3, %s176
      %s178 = smul.u32 15, %s14
      %s179 = smul.u32 %s14, 120
      %s180 = scalar_lea.vmem %s1, %s179
      %v181 = vld [vmem:[%s180] sm:$0xff]
      %v182 = vld [vmem:[%s180 + $0x8] sm:$0xff]
      %v183 = vld [vmem:[%s180 + $0x10] sm:$0xff]
      %v184 = vld [vmem:[%s180 + $0x18] sm:$0xff]
      %v185 = vld [vmem:[%s180 + $0x20] sm:$0xff]
      %v186 = vld [vmem:[%s180 + $0x28] sm:$0xff]
      %v187 = vld [vmem:[%s180 + $0x30] sm:$0xff]
      %v188 = vld [vmem:[%s180 + $0x38] sm:$0xff]
      %v189 = vld [vmem:[%s180 + $0x40] sm:$0xff]
      %v190 = vld [vmem:[%s180 + $0x48] sm:$0xff]
      %v191 = vld [vmem:[%s180 + $0x50] sm:$0xff]
      %v192 = vld [vmem:[%s180 + $0x58] sm:$0xff]
      %v193 = vld [vmem:[%s180 + $0x60] sm:$0xff]
      %v194 = vld [vmem:[%s180 + $0x68] sm:$0xff]
      %v195 = vld [vmem:[%s180 + $0x70] sm:$0xff]
      %s196 = scalar_lea.vmem %s2, %s179
      %v197 = vld [vmem:[%s196] sm:$0xff]
      %v198 = vld [vmem:[%s196 + $0x8] sm:$0xff]
      %v199 = vld [vmem:[%s196 + $0x10] sm:$0xff]
      %v200 = vld [vmem:[%s196 + $0x18] sm:$0xff]
      %v201 = vld [vmem:[%s196 + $0x20] sm:$0xff]
      %v202 = vld [vmem:[%s196 + $0x28] sm:$0xff]
      %v203 = vld [vmem:[%s196 + $0x30] sm:$0xff]
      %v204 = vld [vmem:[%s196 + $0x38] sm:$0xff]
      %v205 = vld [vmem:[%s196 + $0x40] sm:$0xff]
      %v206 = vld [vmem:[%s196 + $0x48] sm:$0xff]
      %v207 = vld [vmem:[%s196 + $0x50] sm:$0xff]
      %v208 = vld [vmem:[%s196 + $0x58] sm:$0xff]
      %v209 = vld [vmem:[%s196 + $0x60] sm:$0xff]
      %v210 = vld [vmem:[%s196 + $0x68] sm:$0xff]
      %v211 = vld [vmem:[%s196 + $0x70] sm:$0xff]
      %v212 = vld [vmem:[%s170] sm:$0xff]
      %v213 = vld [vmem:[%s170 + $0x8] sm:$0xff]
      %v214 = vld [vmem:[%s170 + $0x10] sm:$0xff]
      %v215 = vld [vmem:[%s170 + $0x18] sm:$0xff]
      %v216 = vld [vmem:[%s170 + $0x20] sm:$0xff]
      %v217 = vld [vmem:[%s170 + $0x28] sm:$0xff]
      %v218 = vld [vmem:[%s170 + $0x30] sm:$0xff]
      %v219 = vld [vmem:[%s170 + $0x38] sm:$0xff]
      %v220 = vld [vmem:[%s170 + $0x40] sm:$0xff]
      %v221 = vld [vmem:[%s170 + $0x48] sm:$0xff]
      %v222 = vld [vmem:[%s170 + $0x50] sm:$0xff]
      %v223 = vld [vmem:[%s170 + $0x58] sm:$0xff]
      %v224 = vld [vmem:[%s170 + $0x60] sm:$0xff]
      %v225 = vld [vmem:[%s170 + $0x68] sm:$0xff]
      %v226 = vld [vmem:[%s170 + $0x70] sm:$0xff]
      %v227 = vld [vmem:[%s170 + $0x78] sm:$0xff]
      %v228 = vld [vmem:[%s170 + $0x80] sm:$0xff]
      %v229 = vld [vmem:[%s170 + $0x88] sm:$0xff]
      %v230 = vld [vmem:[%s170 + $0x90] sm:$0xff]
      %v231 = vld [vmem:[%s170 + $0x98] sm:$0xff]
      %v232 = vld [vmem:[%s170 + $0xa0] sm:$0xff]
      %v233 = vld [vmem:[%s170 + $0xa8] sm:$0xff]
      %v234 = vld [vmem:[%s170 + $0xb0] sm:$0xff]
      %v235 = vld [vmem:[%s170 + $0xb8] sm:$0xff]
      %v236 = vld [vmem:[%s170 + $0xc0] sm:$0xff]
      %v237 = vld [vmem:[%s170 + $0xc8] sm:$0xff]
      %v238 = vld [vmem:[%s170 + $0xd0] sm:$0xff]
      %v239 = vld [vmem:[%s170 + $0xd8] sm:$0xff]
      %v240 = vld [vmem:[%s170 + $0xe0] sm:$0xff]
      %v241 = vld [vmem:[%s170 + $0xe8] sm:$0xff]
      %v242 = vld [vmem:[%s170 + $0xf0] sm:$0xff]
      %v243 = vld [vmem:[%s170 + $0xf8] sm:$0xff]
      %v244 = vld [vmem:[%s170 + $0x100] sm:$0xff]
      %v245 = vld [vmem:[%s170 + $0x108] sm:$0xff]
      %v246 = vld [vmem:[%s170 + $0x110] sm:$0xff]
      %v247 = vld [vmem:[%s170 + $0x118] sm:$0xff]
      %v248 = vld [vmem:[%s170 + $0x120] sm:$0xff]
      %v249 = vld [vmem:[%s170 + $0x128] sm:$0xff]
      %v250 = vld [vmem:[%s170 + $0x130] sm:$0xff]
      %v251 = vld [vmem:[%s170 + $0x138] sm:$0xff]
      %v252 = vld [vmem:[%s170 + $0x140] sm:$0xff]
      %v253 = vld [vmem:[%s170 + $0x148] sm:$0xff]
      %v254 = vld [vmem:[%s170 + $0x150] sm:$0xff]
      %v255 = vld [vmem:[%s170 + $0x158] sm:$0xff]
      %v256 = vld [vmem:[%s170 + $0x160] sm:$0xff]
      %v257 = vld [vmem:[%s170 + $0x168] sm:$0xff]
      %v258 = vld [vmem:[%s170 + $0x170] sm:$0xff]
      %v259 = vld [vmem:[%s170 + $0x178] sm:$0xff]
      %v260 = vld [vmem:[%s170 + $0x180] sm:$0xff]
      %v261 = vld [vmem:[%s170 + $0x188] sm:$0xff]
      %v262 = vld [vmem:[%s170 + $0x190] sm:$0xff]
      %v263 = vld [vmem:[%s170 + $0x198] sm:$0xff]
      %v264 = vld [vmem:[%s170 + $0x1a0] sm:$0xff]
      %v265 = vld [vmem:[%s170 + $0x1a8] sm:$0xff]
      %v266 = vld [vmem:[%s170 + $0x1b0] sm:$0xff]
      %v267 = vld [vmem:[%s170 + $0x1b8] sm:$0xff]
      %v268 = vld [vmem:[%s170 + $0x1c0] sm:$0xff]
      %v269 = vld [vmem:[%s170 + $0x1c8] sm:$0xff]
      %v270 = vld [vmem:[%s170 + $0x1d0] sm:$0xff]
      %v271 = vld [vmem:[%s170 + $0x1d8] sm:$0xff]
      %v272 = vld [vmem:[%s170 + $0x1e0] sm:$0xff]
      %v273 = vld [vmem:[%s170 + $0x1e8] sm:$0xff]
      %v274 = vld [vmem:[%s170 + $0x1f0] sm:$0xff]
      %v275 = vld [vmem:[%s170 + $0x1f8] sm:$0xff]
      %v276 = vld [vmem:[%s170 + $0x200] sm:$0xff]
      %v277 = vld [vmem:[%s170 + $0x208] sm:$0xff]
      %v278 = vld [vmem:[%s170 + $0x210] sm:$0xff]
      %v279 = vld [vmem:[%s170 + $0x218] sm:$0xff]
      %v280 = vld [vmem:[%s170 + $0x220] sm:$0xff]
      %v281 = vld [vmem:[%s170 + $0x228] sm:$0xff]
      %v282 = vld [vmem:[%s170 + $0x230] sm:$0xff]
      %v283 = vld [vmem:[%s170 + $0x238] sm:$0xff]
      %v284 = vld [vmem:[%s170 + $0x240] sm:$0xff]
      %v285 = vld [vmem:[%s170 + $0x248] sm:$0xff]
      %v286 = vld [vmem:[%s170 + $0x250] sm:$0xff]
      %v287 = vld [vmem:[%s170 + $0x258] sm:$0xff]
      %v288 = vld [vmem:[%s170 + $0x260] sm:$0xff]
      %v289 = vld [vmem:[%s170 + $0x268] sm:$0xff]
      %v290 = vld [vmem:[%s170 + $0x270] sm:$0xff]
      %v291 = vld [vmem:[%s170 + $0x278] sm:$0xff]
      %v292 = vld [vmem:[%s170 + $0x280] sm:$0xff]
      %v293 = vld [vmem:[%s170 + $0x288] sm:$0xff]
      %v294 = vld [vmem:[%s170 + $0x290] sm:$0xff]
      %v295 = vld [vmem:[%s170 + $0x298] sm:$0xff]
      %v296 = vld [vmem:[%s170 + $0x2a0] sm:$0xff]
      %v297 = vld [vmem:[%s170 + $0x2a8] sm:$0xff]
      %v298 = vld [vmem:[%s170 + $0x2b0] sm:$0xff]
      %v299 = vld [vmem:[%s170 + $0x2b8] sm:$0xff]
      %v300 = vld [vmem:[%s170 + $0x2c0] sm:$0xff]
      %v301 = vld [vmem:[%s170 + $0x2c8] sm:$0xff]
      %v302 = vld [vmem:[%s170 + $0x2d0] sm:$0xff]
      %v303 = vld [vmem:[%s170 + $0x2d8] sm:$0xff]
      %v304 = vld [vmem:[%s170 + $0x2e0] sm:$0xff]
      %v305 = vld [vmem:[%s170 + $0x2e8] sm:$0xff]
      %v306 = vld [vmem:[%s170 + $0x2f0] sm:$0xff]
      %v307 = vld [vmem:[%s170 + $0x2f8] sm:$0xff]
      %v308 = vld [vmem:[%s170 + $0x300] sm:$0xff]
      %v309 = vld [vmem:[%s170 + $0x308] sm:$0xff]
      %v310 = vld [vmem:[%s170 + $0x310] sm:$0xff]
      %v311 = vld [vmem:[%s170 + $0x318] sm:$0xff]
      %v312 = vld [vmem:[%s170 + $0x320] sm:$0xff]
      %v313 = vld [vmem:[%s170 + $0x328] sm:$0xff]
      %v314 = vld [vmem:[%s170 + $0x330] sm:$0xff]
      %v315 = vld [vmem:[%s170 + $0x338] sm:$0xff]
      %v316 = vld [vmem:[%s170 + $0x340] sm:$0xff]
      %v317 = vadd.f32 %v212, %v213
      %v318 = vadd.f32 %v317, %v214
      %v319 = vadd.f32 %v318, %v215
      %v320 = vadd.f32 %v319, %v216
      %v321 = vadd.f32 %v320, %v217
      %vm322 = vcmask 130048
      %v323 = vsel %vm322, %v218, 0.0
      %v324 = vadd.f32 %v321, %v323
      %325 = vadd.xlane.f32.xlu0 %v324
      %v326 = vpop.xlane.xlu0 %325
      %v327 = vadd.f32 %v219, %v220
      %v328 = vadd.f32 %v327, %v221
      %v329 = vadd.f32 %v328, %v222
      %v330 = vadd.f32 %v329, %v223
      %v331 = vadd.f32 %v330, %v224
      %v332 = vsel %vm322, %v225, 0.0
      %v333 = vadd.f32 %v331, %v332
      %334 = vadd.xlane.f32.xlu0 %v333
      %v335 = vpop.xlane.xlu0 %334
      %v336 = vadd.f32 %v226, %v227
      %v337 = vadd.f32 %v336, %v228
      %v338 = vadd.f32 %v337, %v229
      %v339 = vadd.f32 %v338, %v230
      %v340 = vadd.f32 %v339, %v231
      %v341 = vsel %vm322, %v232, 0.0
      %v342 = vadd.f32 %v340, %v341
      %343 = vadd.xlane.f32.xlu0 %v342
      %v344 = vpop.xlane.xlu0 %343
      %v345 = vadd.f32 %v233, %v234
      %v346 = vadd.f32 %v345, %v235
      %v347 = vadd.f32 %v346, %v236
      %v348 = vadd.f32 %v347, %v237
      %v349 = vadd.f32 %v348, %v238
      %v350 = vsel %vm322, %v239, 0.0
      %v351 = vadd.f32 %v349, %v350
      %352 = vadd.xlane.f32.xlu0 %v351
      %v353 = vpop.xlane.xlu0 %352
      %v354 = vadd.f32 %v240, %v241
      %v355 = vadd.f32 %v354, %v242
      %v356 = vadd.f32 %v355, %v243
      %v357 = vadd.f32 %v356, %v244
      %v358 = vadd.f32 %v357, %v245
      %v359 = vsel %vm322, %v246, 0.0
      %v360 = vadd.f32 %v358, %v359
      %361 = vadd.xlane.f32.xlu0 %v360
      %v362 = vpop.xlane.xlu0 %361
      %v363 = vadd.f32 %v247, %v248
      %v364 = vadd.f32 %v363, %v249
      %v365 = vadd.f32 %v364, %v250
      %v366 = vadd.f32 %v365, %v251
      %v367 = vadd.f32 %v366, %v252
      %v368 = vsel %vm322, %v253, 0.0
      %v369 = vadd.f32 %v367, %v368
      %370 = vadd.xlane.f32.xlu0 %v369
      %v371 = vpop.xlane.xlu0 %370
      %v372 = vadd.f32 %v254, %v255
      %v373 = vadd.f32 %v372, %v256
      %v374 = vadd.f32 %v373, %v257
      %v375 = vadd.f32 %v374, %v258
      %v376 = vadd.f32 %v375, %v259
      %v377 = vsel %vm322, %v260, 0.0
      %v378 = vadd.f32 %v376, %v377
      %379 = vadd.xlane.f32.xlu0 %v378
      %v380 = vpop.xlane.xlu0 %379
      %v381 = vadd.f32 %v261, %v262
      %v382 = vadd.f32 %v381, %v263
      %v383 = vadd.f32 %v382, %v264
      %v384 = vadd.f32 %v383, %v265
      %v385 = vadd.f32 %v384, %v266
      %v386 = vsel %vm322, %v267, 0.0
      %v387 = vadd.f32 %v385, %v386
      %388 = vadd.xlane.f32.xlu0 %v387
      %v389 = vpop.xlane.xlu0 %388
      %v390 = vadd.f32 %v268, %v269
      %v391 = vadd.f32 %v390, %v270
      %v392 = vadd.f32 %v391, %v271
      %v393 = vadd.f32 %v392, %v272
      %v394 = vadd.f32 %v393, %v273
      %v395 = vsel %vm322, %v274, 0.0
      %v396 = vadd.f32 %v394, %v395
      %397 = vadd.xlane.f32.xlu0 %v396
      %v398 = vpop.xlane.xlu0 %397
      %v399 = vadd.f32 %v275, %v276
      %v400 = vadd.f32 %v399, %v277
      %v401 = vadd.f32 %v400, %v278
      %v402 = vadd.f32 %v401, %v279
      %v403 = vadd.f32 %v402, %v280
      %v404 = vsel %vm322, %v281, 0.0
      %v405 = vadd.f32 %v403, %v404
      %406 = vadd.xlane.f32.xlu0 %v405
      %v407 = vpop.xlane.xlu0 %406
      %v408 = vadd.f32 %v282, %v283
      %v409 = vadd.f32 %v408, %v284
      %v410 = vadd.f32 %v409, %v285
      %v411 = vadd.f32 %v410, %v286
      %v412 = vadd.f32 %v411, %v287
      %v413 = vsel %vm322, %v288, 0.0
      %v414 = vadd.f32 %v412, %v413
      %415 = vadd.xlane.f32.xlu0 %v414
      %v416 = vpop.xlane.xlu0 %415
      %v417 = vadd.f32 %v289, %v290
      %v418 = vadd.f32 %v417, %v291
      %v419 = vadd.f32 %v418, %v292
      %v420 = vadd.f32 %v419, %v293
      %v421 = vadd.f32 %v420, %v294
      %v422 = vsel %vm322, %v295, 0.0
      %v423 = vadd.f32 %v421, %v422
      %424 = vadd.xlane.f32.xlu0 %v423
      %v425 = vpop.xlane.xlu0 %424
      %v426 = vadd.f32 %v296, %v297
      %v427 = vadd.f32 %v426, %v298
      %v428 = vadd.f32 %v427, %v299
      %v429 = vadd.f32 %v428, %v300
      %v430 = vadd.f32 %v429, %v301
      %v431 = vsel %vm322, %v302, 0.0
      %v432 = vadd.f32 %v430, %v431
      %433 = vadd.xlane.f32.xlu0 %v432
      %v434 = vpop.xlane.xlu0 %433
      %v435 = vadd.f32 %v303, %v304
      %v436 = vadd.f32 %v435, %v305
      %v437 = vadd.f32 %v436, %v306
      %v438 = vadd.f32 %v437, %v307
      %v439 = vadd.f32 %v438, %v308
      %v440 = vsel %vm322, %v309, 0.0
      %v441 = vadd.f32 %v439, %v440
      %442 = vadd.xlane.f32.xlu0 %v441
      %v443 = vpop.xlane.xlu0 %442
      %v444 = vadd.f32 %v310, %v311
      %v445 = vadd.f32 %v444, %v312
      %v446 = vadd.f32 %v445, %v313
      %v447 = vadd.f32 %v446, %v314
      %v448 = vadd.f32 %v447, %v315
      %v449 = vsel %vm322, %v316, 0.0
      %v450 = vadd.f32 %v448, %v449
      %451 = vadd.xlane.f32.xlu0 %v450
      %v452 = vpop.xlane.xlu0 %451
      %v453 = vmul.f32 %v326, 0.0012755102
      %v454 = vmul.f32 %v335, 0.0012755102
      %v455 = vmul.f32 %v344, 0.0012755102
      %v456 = vmul.f32 %v353, 0.0012755102
      %v457 = vmul.f32 %v362, 0.0012755102
      %v458 = vmul.f32 %v371, 0.0012755102
      %v459 = vmul.f32 %v380, 0.0012755102
      %v460 = vmul.f32 %v389, 0.0012755102
      %v461 = vmul.f32 %v398, 0.0012755102
      %v462 = vmul.f32 %v407, 0.0012755102
      %v463 = vmul.f32 %v416, 0.0012755102
      %v464 = vmul.f32 %v425, 0.0012755102
      %v465 = vmul.f32 %v434, 0.0012755102
      %v466 = vmul.f32 %v443, 0.0012755102
      %v467 = vmul.f32 %v452, 0.0012755102
      %v468 = vsub.f32 %v212, %v453
      %v469 = vsub.f32 %v213, %v453
      %v470 = vsub.f32 %v214, %v453
      %v471 = vsub.f32 %v215, %v453
      %v472 = vsub.f32 %v216, %v453
      %v473 = vsub.f32 %v217, %v453
      %v474 = vsub.f32 %v218, %v453
      %v475 = vsub.f32 %v219, %v454
      %v476 = vsub.f32 %v220, %v454
      %v477 = vsub.f32 %v221, %v454
      %v478 = vsub.f32 %v222, %v454
      %v479 = vsub.f32 %v223, %v454
      %v480 = vsub.f32 %v224, %v454
      %v481 = vsub.f32 %v225, %v454
      %v482 = vsub.f32 %v226, %v455
      %v483 = vsub.f32 %v227, %v455
      %v484 = vsub.f32 %v228, %v455
      %v485 = vsub.f32 %v229, %v455
      %v486 = vsub.f32 %v230, %v455
      %v487 = vsub.f32 %v231, %v455
      %v488 = vsub.f32 %v232, %v455
      %v489 = vsub.f32 %v233, %v456
      %v490 = vsub.f32 %v234, %v456
      %v491 = vsub.f32 %v235, %v456
      %v492 = vsub.f32 %v236, %v456
      %v493 = vsub.f32 %v237, %v456
      %v494 = vsub.f32 %v238, %v456
      %v495 = vsub.f32 %v239, %v456
      %v496 = vsub.f32 %v240, %v457
      %v497 = vsub.f32 %v241, %v457
      %v498 = vsub.f32 %v242, %v457
      %v499 = vsub.f32 %v243, %v457
      %v500 = vsub.f32 %v244, %v457
      %v501 = vsub.f32 %v245, %v457
      %v502 = vsub.f32 %v246, %v457
      %v503 = vsub.f32 %v247, %v458
      %v504 = vsub.f32 %v248, %v458
      %v505 = vsub.f32 %v249, %v458
      %v506 = vsub.f32 %v250, %v458
      %v507 = vsub.f32 %v251, %v458
      %v508 = vsub.f32 %v252, %v458
      %v509 = vsub.f32 %v253, %v458
      %v510 = vsub.f32 %v254, %v459
      %v511 = vsub.f32 %v255, %v459
      %v512 = vsub.f32 %v256, %v459
      %v513 = vsub.f32 %v257, %v459
      %v514 = vsub.f32 %v258, %v459
      %v515 = vsub.f32 %v259, %v459
      %v516 = vsub.f32 %v260, %v459
      %v517 = vsub.f32 %v261, %v460
      %v518 = vsub.f32 %v262, %v460
      %v519 = vsub.f32 %v263, %v460
      %v520 = vsub.f32 %v264, %v460
      %v521 = vsub.f32 %v265, %v460
      %v522 = vsub.f32 %v266, %v460
      %v523 = vsub.f32 %v267, %v460
      %v524 = vsub.f32 %v268, %v461
      %v525 = vsub.f32 %v269, %v461
      %v526 = vsub.f32 %v270, %v461
      %v527 = vsub.f32 %v271, %v461
      %v528 = vsub.f32 %v272, %v461
      %v529 = vsub.f32 %v273, %v461
      %v530 = vsub.f32 %v274, %v461
      %v531 = vsub.f32 %v275, %v462
      %v532 = vsub.f32 %v276, %v462
      %v533 = vsub.f32 %v277, %v462
      %v534 = vsub.f32 %v278, %v462
      %v535 = vsub.f32 %v279, %v462
      %v536 = vsub.f32 %v280, %v462
      %v537 = vsub.f32 %v281, %v462
      %v538 = vsub.f32 %v282, %v463
      %v539 = vsub.f32 %v283, %v463
      %v540 = vsub.f32 %v284, %v463
      %v541 = vsub.f32 %v285, %v463
      %v542 = vsub.f32 %v286, %v463
      %v543 = vsub.f32 %v287, %v463
      %v544 = vsub.f32 %v288, %v463
      %v545 = vsub.f32 %v289, %v464
      %v546 = vsub.f32 %v290, %v464
      %v547 = vsub.f32 %v291, %v464
      %v548 = vsub.f32 %v292, %v464
      %v549 = vsub.f32 %v293, %v464
      %v550 = vsub.f32 %v294, %v464
      %v551 = vsub.f32 %v295, %v464
      %v552 = vsub.f32 %v296, %v465
      %v553 = vsub.f32 %v297, %v465
      %v554 = vsub.f32 %v298, %v465
      %v555 = vsub.f32 %v299, %v465
      %v556 = vsub.f32 %v300, %v465
      %v557 = vsub.f32 %v301, %v465
      %v558 = vsub.f32 %v302, %v465
      %v559 = vsub.f32 %v303, %v466
      %v560 = vsub.f32 %v304, %v466
      %v561 = vsub.f32 %v305, %v466
      %v562 = vsub.f32 %v306, %v466
      %v563 = vsub.f32 %v307, %v466
      %v564 = vsub.f32 %v308, %v466
      %v565 = vsub.f32 %v309, %v466
      %v566 = vsub.f32 %v310, %v467
      %v567 = vsub.f32 %v311, %v467
      %v568 = vsub.f32 %v312, %v467
      %v569 = vsub.f32 %v313, %v467
      %v570 = vsub.f32 %v314, %v467
      %v571 = vsub.f32 %v315, %v467
      %v572 = vsub.f32 %v316, %v467
      %v573 = vmul.f32 %v468, %v468
      %v574 = vmul.f32 %v469, %v469
      %v575 = vmul.f32 %v470, %v470
      %v576 = vmul.f32 %v471, %v471
      %v577 = vmul.f32 %v472, %v472
      %v578 = vmul.f32 %v473, %v473
      %v579 = vmul.f32 %v474, %v474
      %v580 = vmul.f32 %v475, %v475
      %v581 = vmul.f32 %v476, %v476
      %v582 = vmul.f32 %v477, %v477
      %v583 = vmul.f32 %v478, %v478
      %v584 = vmul.f32 %v479, %v479
      %v585 = vmul.f32 %v480, %v480
      %v586 = vmul.f32 %v481, %v481
      %v587 = vmul.f32 %v482, %v482
      %v588 = vmul.f32 %v483, %v483
      %v589 = vmul.f32 %v484, %v484
      %v590 = vmul.f32 %v485, %v485
      %v591 = vmul.f32 %v486, %v486
      %v592 = vmul.f32 %v487, %v487
      %v593 = vmul.f32 %v488, %v488
      %v594 = vmul.f32 %v489, %v489
      %v595 = vmul.f32 %v490, %v490
      %v596 = vmul.f32 %v491, %v491
      %v597 = vmul.f32 %v492, %v492
      %v598 = vmul.f32 %v493, %v493
      %v599 = vmul.f32 %v494, %v494
      %v600 = vmul.f32 %v495, %v495
      %v601 = vmul.f32 %v496, %v496
      %v602 = vmul.f32 %v497, %v497
      %v603 = vmul.f32 %v498, %v498
      %v604 = vmul.f32 %v499, %v499
      %v605 = vmul.f32 %v500, %v500
      %v606 = vmul.f32 %v501, %v501
      %v607 = vmul.f32 %v502, %v502
      %v608 = vmul.f32 %v503, %v503
      %v609 = vmul.f32 %v504, %v504
      %v610 = vmul.f32 %v505, %v505
      %v611 = vmul.f32 %v506, %v506
      %v612 = vmul.f32 %v507, %v507
      %v613 = vmul.f32 %v508, %v508
      %v614 = vmul.f32 %v509, %v509
      %v615 = vmul.f32 %v510, %v510
      %v616 = vmul.f32 %v511, %v511
      %v617 = vmul.f32 %v512, %v512
      %v618 = vmul.f32 %v513, %v513
      %v619 = vmul.f32 %v514, %v514
      %v620 = vmul.f32 %v515, %v515
      %v621 = vmul.f32 %v516, %v516
      %v622 = vmul.f32 %v517, %v517
      %v623 = vmul.f32 %v518, %v518
      %v624 = vmul.f32 %v519, %v519
      %v625 = vmul.f32 %v520, %v520
      %v626 = vmul.f32 %v521, %v521
      %v627 = vmul.f32 %v522, %v522
      %v628 = vmul.f32 %v523, %v523
      %v629 = vmul.f32 %v524, %v524
      %v630 = vmul.f32 %v525, %v525
      %v631 = vmul.f32 %v526, %v526
      %v632 = vmul.f32 %v527, %v527
      %v633 = vmul.f32 %v528, %v528
      %v634 = vmul.f32 %v529, %v529
      %v635 = vmul.f32 %v530, %v530
      %v636 = vmul.f32 %v531, %v531
      %v637 = vmul.f32 %v532, %v532
      %v638 = vmul.f32 %v533, %v533
      %v639 = vmul.f32 %v534, %v534
      %v640 = vmul.f32 %v535, %v535
      %v641 = vmul.f32 %v536, %v536
      %v642 = vmul.f32 %v537, %v537
      %v643 = vmul.f32 %v538, %v538
      %v644 = vmul.f32 %v539, %v539
      %v645 = vmul.f32 %v540, %v540
      %v646 = vmul.f32 %v541, %v541
      %v647 = vmul.f32 %v542, %v542
      %v648 = vmul.f32 %v543, %v543
      %v649 = vmul.f32 %v544, %v544
      %v650 = vmul.f32 %v545, %v545
      %v651 = vmul.f32 %v546, %v546
      %v652 = vmul.f32 %v547, %v547
      %v653 = vmul.f32 %v548, %v548
      %v654 = vmul.f32 %v549, %v549
      %v655 = vmul.f32 %v550, %v550
      %v656 = vmul.f32 %v551, %v551
      %v657 = vmul.f32 %v552, %v552
      %v658 = vmul.f32 %v553, %v553
      %v659 = vmul.f32 %v554, %v554
      %v660 = vmul.f32 %v555, %v555
      %v661 = vmul.f32 %v556, %v556
      %v662 = vmul.f32 %v557, %v557
      %v663 = vmul.f32 %v558, %v558
      %v664 = vmul.f32 %v559, %v559
      %v665 = vmul.f32 %v560, %v560
      %v666 = vmul.f32 %v561, %v561
      %v667 = vmul.f32 %v562, %v562
      %v668 = vmul.f32 %v563, %v563
      %v669 = vmul.f32 %v564, %v564
      %v670 = vmul.f32 %v565, %v565
      %v671 = vmul.f32 %v566, %v566
      %v672 = vmul.f32 %v567, %v567
      %v673 = vmul.f32 %v568, %v568
      %v674 = vmul.f32 %v569, %v569
      %v675 = vmul.f32 %v570, %v570
      %v676 = vmul.f32 %v571, %v571
      %v677 = vmul.f32 %v572, %v572
      %v678 = vadd.f32 %v573, %v574
      %v679 = vadd.f32 %v678, %v575
      %v680 = vadd.f32 %v679, %v576
      %v681 = vadd.f32 %v680, %v577
      %v682 = vadd.f32 %v681, %v578
      %v683 = vsel %vm322, %v579, 0.0
      %v684 = vadd.f32 %v682, %v683
      %685 = vadd.xlane.f32.xlu0 %v684
      %v686 = vpop.xlane.xlu0 %685
      %v687 = vadd.f32 %v580, %v581
      %v688 = vadd.f32 %v687, %v582
      %v689 = vadd.f32 %v688, %v583
      %v690 = vadd.f32 %v689, %v584
      %v691 = vadd.f32 %v690, %v585
      %v692 = vsel %vm322, %v586, 0.0
      %v693 = vadd.f32 %v691, %v692
      %694 = vadd.xlane.f32.xlu0 %v693
      %v695 = vpop.xlane.xlu0 %694
      %v696 = vadd.f32 %v587, %v588
      %v697 = vadd.f32 %v696, %v589
      %v698 = vadd.f32 %v697, %v590
      %v699 = vadd.f32 %v698, %v591
      %v700 = vadd.f32 %v699, %v592
      %v701 = vsel %vm322, %v593, 0.0
      %v702 = vadd.f32 %v700, %v701
      %703 = vadd.xlane.f32.xlu0 %v702
      %v704 = vpop.xlane.xlu0 %703
      %v705 = vadd.f32 %v594, %v595
      %v706 = vadd.f32 %v705, %v596
      %v707 = vadd.f32 %v706, %v597
      %v708 = vadd.f32 %v707, %v598
      %v709 = vadd.f32 %v708, %v599
      %v710 = vsel %vm322, %v600, 0.0
      %v711 = vadd.f32 %v709, %v710
      %712 = vadd.xlane.f32.xlu0 %v711
      %v713 = vpop.xlane.xlu0 %712
      %v714 = vadd.f32 %v601, %v602
      %v715 = vadd.f32 %v714, %v603
      %v716 = vadd.f32 %v715, %v604
      %v717 = vadd.f32 %v716, %v605
      %v718 = vadd.f32 %v717, %v606
      %v719 = vsel %vm322, %v607, 0.0
      %v720 = vadd.f32 %v718, %v719
      %721 = vadd.xlane.f32.xlu0 %v720
      %v722 = vpop.xlane.xlu0 %721
      %v723 = vadd.f32 %v608, %v609
      %v724 = vadd.f32 %v723, %v610
      %v725 = vadd.f32 %v724, %v611
      %v726 = vadd.f32 %v725, %v612
      %v727 = vadd.f32 %v726, %v613
      %v728 = vsel %vm322, %v614, 0.0
      %v729 = vadd.f32 %v727, %v728
      %730 = vadd.xlane.f32.xlu0 %v729
      %v731 = vpop.xlane.xlu0 %730
      %v732 = vadd.f32 %v615, %v616
      %v733 = vadd.f32 %v732, %v617
      %v734 = vadd.f32 %v733, %v618
      %v735 = vadd.f32 %v734, %v619
      %v736 = vadd.f32 %v735, %v620
      %v737 = vsel %vm322, %v621, 0.0
      %v738 = vadd.f32 %v736, %v737
      %739 = vadd.xlane.f32.xlu0 %v738
      %v740 = vpop.xlane.xlu0 %739
      %v741 = vadd.f32 %v622, %v623
      %v742 = vadd.f32 %v741, %v624
      %v743 = vadd.f32 %v742, %v625
      %v744 = vadd.f32 %v743, %v626
      %v745 = vadd.f32 %v744, %v627
      %v746 = vsel %vm322, %v628, 0.0
      %v747 = vadd.f32 %v745, %v746
      %748 = vadd.xlane.f32.xlu0 %v747
      %v749 = vpop.xlane.xlu0 %748
      %v750 = vadd.f32 %v629, %v630
      %v751 = vadd.f32 %v750, %v631
      %v752 = vadd.f32 %v751, %v632
      %v753 = vadd.f32 %v752, %v633
      %v754 = vadd.f32 %v753, %v634
      %v755 = vsel %vm322, %v635, 0.0
      %v756 = vadd.f32 %v754, %v755
      %757 = vadd.xlane.f32.xlu0 %v756
      %v758 = vpop.xlane.xlu0 %757
      %v759 = vadd.f32 %v636, %v637
      %v760 = vadd.f32 %v759, %v638
      %v761 = vadd.f32 %v760, %v639
      %v762 = vadd.f32 %v761, %v640
      %v763 = vadd.f32 %v762, %v641
      %v764 = vsel %vm322, %v642, 0.0
      %v765 = vadd.f32 %v763, %v764
      %766 = vadd.xlane.f32.xlu0 %v765
      %v767 = vpop.xlane.xlu0 %766
      %v768 = vadd.f32 %v643, %v644
      %v769 = vadd.f32 %v768, %v645
      %v770 = vadd.f32 %v769, %v646
      %v771 = vadd.f32 %v770, %v647
      %v772 = vadd.f32 %v771, %v648
      %v773 = vsel %vm322, %v649, 0.0
      %v774 = vadd.f32 %v772, %v773
      %775 = vadd.xlane.f32.xlu0 %v774
      %v776 = vpop.xlane.xlu0 %775
      %v777 = vadd.f32 %v650, %v651
      %v778 = vadd.f32 %v777, %v652
      %v779 = vadd.f32 %v778, %v653
      %v780 = vadd.f32 %v779, %v654
      %v781 = vadd.f32 %v780, %v655
      %v782 = vsel %vm322, %v656, 0.0
      %v783 = vadd.f32 %v781, %v782
      %784 = vadd.xlane.f32.xlu0 %v783
      %v785 = vpop.xlane.xlu0 %784
      %v786 = vadd.f32 %v657, %v658
      %v787 = vadd.f32 %v786, %v659
      %v788 = vadd.f32 %v787, %v660
      %v789 = vadd.f32 %v788, %v661
      %v790 = vadd.f32 %v789, %v662
      %v791 = vsel %vm322, %v663, 0.0
      %v792 = vadd.f32 %v790, %v791
      %793 = vadd.xlane.f32.xlu0 %v792
      %v794 = vpop.xlane.xlu0 %793
      %v795 = vadd.f32 %v664, %v665
      %v796 = vadd.f32 %v795, %v666
      %v797 = vadd.f32 %v796, %v667
      %v798 = vadd.f32 %v797, %v668
      %v799 = vadd.f32 %v798, %v669
      %v800 = vsel %vm322, %v670, 0.0
      %v801 = vadd.f32 %v799, %v800
      %802 = vadd.xlane.f32.xlu0 %v801
      %v803 = vpop.xlane.xlu0 %802
      %v804 = vadd.f32 %v671, %v672
      %v805 = vadd.f32 %v804, %v673
      %v806 = vadd.f32 %v805, %v674
      %v807 = vadd.f32 %v806, %v675
      %v808 = vadd.f32 %v807, %v676
      %v809 = vsel %vm322, %v677, 0.0
      %v810 = vadd.f32 %v808, %v809
      %811 = vadd.xlane.f32.xlu0 %v810
      %v812 = vpop.xlane.xlu0 %811
      %v813 = vmul.f32 %v686, 0.0012755102
      %v814 = vmul.f32 %v695, 0.0012755102
      %v815 = vmul.f32 %v704, 0.0012755102
      %v816 = vmul.f32 %v713, 0.0012755102
      %v817 = vmul.f32 %v722, 0.0012755102
      %v818 = vmul.f32 %v731, 0.0012755102
      %v819 = vmul.f32 %v740, 0.0012755102
      %v820 = vmul.f32 %v749, 0.0012755102
      %v821 = vmul.f32 %v758, 0.0012755102
      %v822 = vmul.f32 %v767, 0.0012755102
      %v823 = vmul.f32 %v776, 0.0012755102
      %v824 = vmul.f32 %v785, 0.0012755102
      %v825 = vmul.f32 %v794, 0.0012755102
      %v826 = vmul.f32 %v803, 0.0012755102
      %v827 = vmul.f32 %v812, 0.0012755102
      %v828 = vadd.f32 %v813, 1e-05
      %v829 = vadd.f32 %v814, 1e-05
      %v830 = vadd.f32 %v815, 1e-05
      %v831 = vadd.f32 %v816, 1e-05
      %v832 = vadd.f32 %v817, 1e-05
      %v833 = vadd.f32 %v818, 1e-05
      %v834 = vadd.f32 %v819, 1e-05
      %v835 = vadd.f32 %v820, 1e-05
      %v836 = vadd.f32 %v821, 1e-05
      %v837 = vadd.f32 %v822, 1e-05
      %v838 = vadd.f32 %v823, 1e-05
      %v839 = vadd.f32 %v824, 1e-05
      %v840 = vadd.f32 %v825, 1e-05
      %v841 = vadd.f32 %v826, 1e-05
      %v842 = vadd.f32 %v827, 1e-05
      %v843 = vrsqrt.pop %v828
      %v844 = vrsqrt.pop %v829
      %v845 = vrsqrt.pop %v830
      %v846 = vrsqrt.pop %v831
      %v847 = vrsqrt.pop %v832
      %v848 = vrsqrt.pop %v833
      %v849 = vrsqrt.pop %v834
      %v850 = vrsqrt.pop %v835
      %v851 = vrsqrt.pop %v836
      %v852 = vrsqrt.pop %v837
      %v853 = vrsqrt.pop %v838
      %v854 = vrsqrt.pop %v839
      %v855 = vrsqrt.pop %v840
      %v856 = vrsqrt.pop %v841
      %v857 = vrsqrt.pop %v842
      %v858 = vmul.f32 %v843, %v181
      %v859 = vmul.f32 %v844, %v182
      %v860 = vmul.f32 %v845, %v183
      %v861 = vmul.f32 %v846, %v184
      %v862 = vmul.f32 %v847, %v185
      %v863 = vmul.f32 %v848, %v186
      %v864 = vmul.f32 %v849, %v187
      %v865 = vmul.f32 %v850, %v188
      %v866 = vmul.f32 %v851, %v189
      %v867 = vmul.f32 %v852, %v190
      %v868 = vmul.f32 %v853, %v191
      %v869 = vmul.f32 %v854, %v192
      %v870 = vmul.f32 %v855, %v193
      %v871 = vmul.f32 %v856, %v194
      %v872 = vmul.f32 %v857, %v195
      %874 = vset.pattern.permute.xlu0 0
      %875 = vperm.xlu0 %874, %v858
      %v876 = vpop.permute.xlu0 %875
      %879 = vset.pattern.permute.xlu0 0
      %880 = vperm.xlu0 %879, %v859
      %v881 = vpop.permute.xlu0 %880
      %884 = vset.pattern.permute.xlu0 0
      %885 = vperm.xlu0 %884, %v860
      %v886 = vpop.permute.xlu0 %885
      %889 = vset.pattern.permute.xlu0 0
      %890 = vperm.xlu0 %889, %v861
      %v891 = vpop.permute.xlu0 %890
      %894 = vset.pattern.permute.xlu0 0
      %895 = vperm.xlu0 %894, %v862
      %v896 = vpop.permute.xlu0 %895
      %899 = vset.pattern.permute.xlu0 0
      %900 = vperm.xlu0 %899, %v863
      %v901 = vpop.permute.xlu0 %900
      %904 = vset.pattern.permute.xlu0 0
      %905 = vperm.xlu0 %904, %v864
      %v906 = vpop.permute.xlu0 %905
      %909 = vset.pattern.permute.xlu0 0
      %910 = vperm.xlu0 %909, %v865
      %v911 = vpop.permute.xlu0 %910
      %914 = vset.pattern.permute.xlu0 0
      %915 = vperm.xlu0 %914, %v866
      %v916 = vpop.permute.xlu0 %915
      %919 = vset.pattern.permute.xlu0 0
      %920 = vperm.xlu0 %919, %v867
      %v921 = vpop.permute.xlu0 %920
      %924 = vset.pattern.permute.xlu0 0
      %925 = vperm.xlu0 %924, %v868
      %v926 = vpop.permute.xlu0 %925
      %929 = vset.pattern.permute.xlu0 0
      %930 = vperm.xlu0 %929, %v869
      %v931 = vpop.permute.xlu0 %930
      %934 = vset.pattern.permute.xlu0 0
      %935 = vperm.xlu0 %934, %v870
      %v936 = vpop.permute.xlu0 %935
      %939 = vset.pattern.permute.xlu0 0
      %940 = vperm.xlu0 %939, %v871
      %v941 = vpop.permute.xlu0 %940
      %944 = vset.pattern.permute.xlu0 0
      %945 = vperm.xlu0 %944, %v872
      %v946 = vpop.permute.xlu0 %945
      %v948 = vmul.f32 %v468, %v876
      %v949 = vmul.f32 %v469, %v876
      %v950 = vmul.f32 %v470, %v876
      %v951 = vmul.f32 %v471, %v876
      %v952 = vmul.f32 %v472, %v876
      %v953 = vmul.f32 %v473, %v876
      %v954 = vmul.f32 %v474, %v876
      %v955 = vmul.f32 %v475, %v881
      %v956 = vmul.f32 %v476, %v881
      %v957 = vmul.f32 %v477, %v881
      %v958 = vmul.f32 %v478, %v881
      %v959 = vmul.f32 %v479, %v881
      %v960 = vmul.f32 %v480, %v881
      %v961 = vmul.f32 %v481, %v881
      %v962 = vmul.f32 %v482, %v886
      %v963 = vmul.f32 %v483, %v886
      %v964 = vmul.f32 %v484, %v886
      %v965 = vmul.f32 %v485, %v886
      %v966 = vmul.f32 %v486, %v886
      %v967 = vmul.f32 %v487, %v886
      %v968 = vmul.f32 %v488, %v886
      %v969 = vmul.f32 %v489, %v891
      %v970 = vmul.f32 %v490, %v891
      %v971 = vmul.f32 %v491, %v891
      %v972 = vmul.f32 %v492, %v891
      %v973 = vmul.f32 %v493, %v891
      %v974 = vmul.f32 %v494, %v891
      %v975 = vmul.f32 %v495, %v891
      %v976 = vmul.f32 %v496, %v896
      %v977 = vmul.f32 %v497, %v896
      %v978 = vmul.f32 %v498, %v896
      %v979 = vmul.f32 %v499, %v896
      %v980 = vmul.f32 %v500, %v896
      %v981 = vmul.f32 %v501, %v896
      %v982 = vmul.f32 %v502, %v896
      %v983 = vmul.f32 %v503, %v901
      %v984 = vmul.f32 %v504, %v901
      %v985 = vmul.f32 %v505, %v901
      %v986 = vmul.f32 %v506, %v901
      %v987 = vmul.f32 %v507, %v901
      %v988 = vmul.f32 %v508, %v901
      %v989 = vmul.f32 %v509, %v901
      %v990 = vmul.f32 %v510, %v906
      %v991 = vmul.f32 %v511, %v906
      %v992 = vmul.f32 %v512, %v906
      %v993 = vmul.f32 %v513, %v906
      %v994 = vmul.f32 %v514, %v906
      %v995 = vmul.f32 %v515, %v906
      %v996 = vmul.f32 %v516, %v906
      %v997 = vmul.f32 %v517, %v911
      %v998 = vmul.f32 %v518, %v911
      %v999 = vmul.f32 %v519, %v911
      %v1000 = vmul.f32 %v520, %v911
      %v1001 = vmul.f32 %v521, %v911
      %v1002 = vmul.f32 %v522, %v911
      %v1003 = vmul.f32 %v523, %v911
      %v1004 = vmul.f32 %v524, %v916
      %v1005 = vmul.f32 %v525, %v916
      %v1006 = vmul.f32 %v526, %v916
      %v1007 = vmul.f32 %v527, %v916
      %v1008 = vmul.f32 %v528, %v916
      %v1009 = vmul.f32 %v529, %v916
      %v1010 = vmul.f32 %v530, %v916
      %v1011 = vmul.f32 %v531, %v921
      %v1012 = vmul.f32 %v532, %v921
      %v1013 = vmul.f32 %v533, %v921
      %v1014 = vmul.f32 %v534, %v921
      %v1015 = vmul.f32 %v535, %v921
      %v1016 = vmul.f32 %v536, %v921
      %v1017 = vmul.f32 %v537, %v921
      %v1018 = vmul.f32 %v538, %v926
      %v1019 = vmul.f32 %v539, %v926
      %v1020 = vmul.f32 %v540, %v926
      %v1021 = vmul.f32 %v541, %v926
      %v1022 = vmul.f32 %v542, %v926
      %v1023 = vmul.f32 %v543, %v926
      %v1024 = vmul.f32 %v544, %v926
      %v1025 = vmul.f32 %v545, %v931
      %v1026 = vmul.f32 %v546, %v931
      %v1027 = vmul.f32 %v547, %v931
      %v1028 = vmul.f32 %v548, %v931
      %v1029 = vmul.f32 %v549, %v931
      %v1030 = vmul.f32 %v550, %v931
      %v1031 = vmul.f32 %v551, %v931
      %v1032 = vmul.f32 %v552, %v936
      %v1033 = vmul.f32 %v553, %v936
      %v1034 = vmul.f32 %v554, %v936
      %v1035 = vmul.f32 %v555, %v936
      %v1036 = vmul.f32 %v556, %v936
      %v1037 = vmul.f32 %v557, %v936
      %v1038 = vmul.f32 %v558, %v936
      %v1039 = vmul.f32 %v559, %v941
      %v1040 = vmul.f32 %v560, %v941
      %v1041 = vmul.f32 %v561, %v941
      %v1042 = vmul.f32 %v562, %v941
      %v1043 = vmul.f32 %v563, %v941
      %v1044 = vmul.f32 %v564, %v941
      %v1045 = vmul.f32 %v565, %v941
      %v1046 = vmul.f32 %v566, %v946
      %v1047 = vmul.f32 %v567, %v946
      %v1048 = vmul.f32 %v568, %v946
      %v1049 = vmul.f32 %v569, %v946
      %v1050 = vmul.f32 %v570, %v946
      %v1051 = vmul.f32 %v571, %v946
      %v1052 = vmul.f32 %v572, %v946
      %1054 = vset.pattern.permute.xlu0 0
      %1055 = vperm.xlu0 %1054, %v197
      %v1056 = vpop.permute.xlu0 %1055
      %1059 = vset.pattern.permute.xlu0 0
      %1060 = vperm.xlu0 %1059, %v198
      %v1061 = vpop.permute.xlu0 %1060
      %1064 = vset.pattern.permute.xlu0 0
      %1065 = vperm.xlu0 %1064, %v199
      %v1066 = vpop.permute.xlu0 %1065
      %1069 = vset.pattern.permute.xlu0 0
      %1070 = vperm.xlu0 %1069, %v200
      %v1071 = vpop.permute.xlu0 %1070
      %1074 = vset.pattern.permute.xlu0 0
      %1075 = vperm.xlu0 %1074, %v201
      %v1076 = vpop.permute.xlu0 %1075
      %1079 = vset.pattern.permute.xlu0 0
      %1080 = vperm.xlu0 %1079, %v202
      %v1081 = vpop.permute.xlu0 %1080
      %1084 = vset.pattern.permute.xlu0 0
      %1085 = vperm.xlu0 %1084, %v203
      %v1086 = vpop.permute.xlu0 %1085
      %1089 = vset.pattern.permute.xlu0 0
      %1090 = vperm.xlu0 %1089, %v204
      %v1091 = vpop.permute.xlu0 %1090
      %1094 = vset.pattern.permute.xlu0 0
      %1095 = vperm.xlu0 %1094, %v205
      %v1096 = vpop.permute.xlu0 %1095
      %1099 = vset.pattern.permute.xlu0 0
      %1100 = vperm.xlu0 %1099, %v206
      %v1101 = vpop.permute.xlu0 %1100
      %1104 = vset.pattern.permute.xlu0 0
      %1105 = vperm.xlu0 %1104, %v207
      %v1106 = vpop.permute.xlu0 %1105
      %1109 = vset.pattern.permute.xlu0 0
      %1110 = vperm.xlu0 %1109, %v208
      %v1111 = vpop.permute.xlu0 %1110
      %1114 = vset.pattern.permute.xlu0 0
      %1115 = vperm.xlu0 %1114, %v209
      %v1116 = vpop.permute.xlu0 %1115
      %1119 = vset.pattern.permute.xlu0 0
      %1120 = vperm.xlu0 %1119, %v210
      %v1121 = vpop.permute.xlu0 %1120
      %1124 = vset.pattern.permute.xlu0 0
      %1125 = vperm.xlu0 %1124, %v211
      %v1126 = vpop.permute.xlu0 %1125
      %v1128 = vadd.f32 %v948, %v1056
      %v1129 = vadd.f32 %v949, %v1056
      %v1130 = vadd.f32 %v950, %v1056
      %v1131 = vadd.f32 %v951, %v1056
      %v1132 = vadd.f32 %v952, %v1056
      %v1133 = vadd.f32 %v953, %v1056
      %v1134 = vadd.f32 %v954, %v1056
      %v1135 = vadd.f32 %v955, %v1061
      %v1136 = vadd.f32 %v956, %v1061
      %v1137 = vadd.f32 %v957, %v1061
      %v1138 = vadd.f32 %v958, %v1061
      %v1139 = vadd.f32 %v959, %v1061
      %v1140 = vadd.f32 %v960, %v1061
      %v1141 = vadd.f32 %v961, %v1061
      %v1142 = vadd.f32 %v962, %v1066
      %v1143 = vadd.f32 %v963, %v1066
      %v1144 = vadd.f32 %v964, %v1066
      %v1145 = vadd.f32 %v965, %v1066
      %v1146 = vadd.f32 %v966, %v1066
      %v1147 = vadd.f32 %v967, %v1066
      %v1148 = vadd.f32 %v968, %v1066
      %v1149 = vadd.f32 %v969, %v1071
      %v1150 = vadd.f32 %v970, %v1071
      %v1151 = vadd.f32 %v971, %v1071
      %v1152 = vadd.f32 %v972, %v1071
      %v1153 = vadd.f32 %v973, %v1071
      %v1154 = vadd.f32 %v974, %v1071
      %v1155 = vadd.f32 %v975, %v1071
      %v1156 = vadd.f32 %v976, %v1076
      %v1157 = vadd.f32 %v977, %v1076
      %v1158 = vadd.f32 %v978, %v1076
      %v1159 = vadd.f32 %v979, %v1076
      %v1160 = vadd.f32 %v980, %v1076
      %v1161 = vadd.f32 %v981, %v1076
      %v1162 = vadd.f32 %v982, %v1076
      %v1163 = vadd.f32 %v983, %v1081
      %v1164 = vadd.f32 %v984, %v1081
      %v1165 = vadd.f32 %v985, %v1081
      %v1166 = vadd.f32 %v986, %v1081
      %v1167 = vadd.f32 %v987, %v1081
      %v1168 = vadd.f32 %v988, %v1081
      %v1169 = vadd.f32 %v989, %v1081
      %v1170 = vadd.f32 %v990, %v1086
      %v1171 = vadd.f32 %v991, %v1086
      %v1172 = vadd.f32 %v992, %v1086
      %v1173 = vadd.f32 %v993, %v1086
      %v1174 = vadd.f32 %v994, %v1086
      %v1175 = vadd.f32 %v995, %v1086
      %v1176 = vadd.f32 %v996, %v1086
      %v1177 = vadd.f32 %v997, %v1091
      %v1178 = vadd.f32 %v998, %v1091
      %v1179 = vadd.f32 %v999, %v1091
      %v1180 = vadd.f32 %v1000, %v1091
      %v1181 = vadd.f32 %v1001, %v1091
      %v1182 = vadd.f32 %v1002, %v1091
      %v1183 = vadd.f32 %v1003, %v1091
      %v1184 = vadd.f32 %v1004, %v1096
      %v1185 = vadd.f32 %v1005, %v1096
      %v1186 = vadd.f32 %v1006, %v1096
      %v1187 = vadd.f32 %v1007, %v1096
      %v1188 = vadd.f32 %v1008, %v1096
      %v1189 = vadd.f32 %v1009, %v1096
      %v1190 = vadd.f32 %v1010, %v1096
      %v1191 = vadd.f32 %v1011, %v1101
      %v1192 = vadd.f32 %v1012, %v1101
      %v1193 = vadd.f32 %v1013, %v1101
      %v1194 = vadd.f32 %v1014, %v1101
      %v1195 = vadd.f32 %v1015, %v1101
      %v1196 = vadd.f32 %v1016, %v1101
      %v1197 = vadd.f32 %v1017, %v1101
      %v1198 = vadd.f32 %v1018, %v1106
      %v1199 = vadd.f32 %v1019, %v1106
      %v1200 = vadd.f32 %v1020, %v1106
      %v1201 = vadd.f32 %v1021, %v1106
      %v1202 = vadd.f32 %v1022, %v1106
      %v1203 = vadd.f32 %v1023, %v1106
      %v1204 = vadd.f32 %v1024, %v1106
      %v1205 = vadd.f32 %v1025, %v1111
      %v1206 = vadd.f32 %v1026, %v1111
      %v1207 = vadd.f32 %v1027, %v1111
      %v1208 = vadd.f32 %v1028, %v1111
      %v1209 = vadd.f32 %v1029, %v1111
      %v1210 = vadd.f32 %v1030, %v1111
      %v1211 = vadd.f32 %v1031, %v1111
      %v1212 = vadd.f32 %v1032, %v1116
      %v1213 = vadd.f32 %v1033, %v1116
      %v1214 = vadd.f32 %v1034, %v1116
      %v1215 = vadd.f32 %v1035, %v1116
      %v1216 = vadd.f32 %v1036, %v1116
      %v1217 = vadd.f32 %v1037, %v1116
      %v1218 = vadd.f32 %v1038, %v1116
      %v1219 = vadd.f32 %v1039, %v1121
      %v1220 = vadd.f32 %v1040, %v1121
      %v1221 = vadd.f32 %v1041, %v1121
      %v1222 = vadd.f32 %v1042, %v1121
      %v1223 = vadd.f32 %v1043, %v1121
      %v1224 = vadd.f32 %v1044, %v1121
      %v1225 = vadd.f32 %v1045, %v1121
      %v1226 = vadd.f32 %v1046, %v1126
      %v1227 = vadd.f32 %v1047, %v1126
      %v1228 = vadd.f32 %v1048, %v1126
      %v1229 = vadd.f32 %v1049, %v1126
      %v1230 = vadd.f32 %v1050, %v1126
      %v1231 = vadd.f32 %v1051, %v1126
      %v1232 = vadd.f32 %v1052, %v1126
      %1233 = vst [vmem:[%s177] sm:$0xff] %v1128
      %1234 = vst [vmem:[%s177 + $0x8] sm:$0xff] %v1129
      %1235 = vst [vmem:[%s177 + $0x10] sm:$0xff] %v1130
      %1236 = vst [vmem:[%s177 + $0x18] sm:$0xff] %v1131
      %1237 = vst [vmem:[%s177 + $0x20] sm:$0xff] %v1132
      %1238 = vst [vmem:[%s177 + $0x28] sm:$0xff] %v1133
      %1239 = vst.msk [vmem:[%s177 + $0x30] sm:$0xff] %vm322, %v1134
      %1240 = vst [vmem:[%s177 + $0x38] sm:$0xff] %v1135
      %1241 = vst [vmem:[%s177 + $0x40] sm:$0xff] %v1136
      %1242 = vst [vmem:[%s177 + $0x48] sm:$0xff] %v1137
      %1243 = vst [vmem:[%s177 + $0x50] sm:$0xff] %v1138
      %1244 = vst [vmem:[%s177 + $0x58] sm:$0xff] %v1139
      %1245 = vst [vmem:[%s177 + $0x60] sm:$0xff] %v1140
      %1246 = vst.msk [vmem:[%s177 + $0x68] sm:$0xff] %vm322, %v1141
      %1247 = vst [vmem:[%s177 + $0x70] sm:$0xff] %v1142
      %1248 = vst [vmem:[%s177 + $0x78] sm:$0xff] %v1143
      %1249 = vst [vmem:[%s177 + $0x80] sm:$0xff] %v1144
      %1250 = vst [vmem:[%s177 + $0x88] sm:$0xff] %v1145
      %1251 = vst [vmem:[%s177 + $0x90] sm:$0xff] %v1146
      %1252 = vst [vmem:[%s177 + $0x98] sm:$0xff] %v1147
      %1253 = vst.msk [vmem:[%s177 + $0xa0] sm:$0xff] %vm322, %v1148
      %1254 = vst [vmem:[%s177 + $0xa8] sm:$0xff] %v1149
      %1255 = vst [vmem:[%s177 + $0xb0] sm:$0xff] %v1150
      %1256 = vst [vmem:[%s177 + $0xb8] sm:$0xff] %v1151
      %1257 = vst [vmem:[%s177 + $0xc0] sm:$0xff] %v1152
      %1258 = vst [vmem:[%s177 + $0xc8] sm:$0xff] %v1153
      %1259 = vst [vmem:[%s177 + $0xd0] sm:$0xff] %v1154
      %1260 = vst.msk [vmem:[%s177 + $0xd8] sm:$0xff] %vm322, %v1155
      %1261 = vst [vmem:[%s177 + $0xe0] sm:$0xff] %v1156
      %1262 = vst [vmem:[%s177 + $0xe8] sm:$0xff] %v1157
      %1263 = vst [vmem:[%s177 + $0xf0] sm:$0xff] %v1158
      %1264 = vst [vmem:[%s177 + $0xf8] sm:$0xff] %v1159
      %1265 = vst [vmem:[%s177 + $0x100] sm:$0xff] %v1160
      %1266 = vst [vmem:[%s177 + $0x108] sm:$0xff] %v1161
      %1267 = vst.msk [vmem:[%s177 + $0x110] sm:$0xff] %vm322, %v1162
      %1268 = vst [vmem:[%s177 + $0x118] sm:$0xff] %v1163
      %1269 = vst [vmem:[%s177 + $0x120] sm:$0xff] %v1164
      %1270 = vst [vmem:[%s177 + $0x128] sm:$0xff] %v1165
      %1271 = vst [vmem:[%s177 + $0x130] sm:$0xff] %v1166
      %1272 = vst [vmem:[%s177 + $0x138] sm:$0xff] %v1167
      %1273 = vst [vmem:[%s177 + $0x140] sm:$0xff] %v1168
      %1274 = vst.msk [vmem:[%s177 + $0x148] sm:$0xff] %vm322, %v1169
      %1275 = vst [vmem:[%s177 + $0x150] sm:$0xff] %v1170
      %1276 = vst [vmem:[%s177 + $0x158] sm:$0xff] %v1171
      %1277 = vst [vmem:[%s177 + $0x160] sm:$0xff] %v1172
      %1278 = vst [vmem:[%s177 + $0x168] sm:$0xff] %v1173
      %1279 = vst [vmem:[%s177 + $0x170] sm:$0xff] %v1174
      %1280 = vst [vmem:[%s177 + $0x178] sm:$0xff] %v1175
      %1281 = vst.msk [vmem:[%s177 + $0x180] sm:$0xff] %vm322, %v1176
      %1282 = vst [vmem:[%s177 + $0x188] sm:$0xff] %v1177
      %1283 = vst [vmem:[%s177 + $0x190] sm:$0xff] %v1178
      %1284 = vst [vmem:[%s177 + $0x198] sm:$0xff] %v1179
      %1285 = vst [vmem:[%s177 + $0x1a0] sm:$0xff] %v1180
      %1286 = vst [vmem:[%s177 + $0x1a8] sm:$0xff] %v1181
      %1287 = vst [vmem:[%s177 + $0x1b0] sm:$0xff] %v1182
      %1288 = vst.msk [vmem:[%s177 + $0x1b8] sm:$0xff] %vm322, %v1183
      %1289 = vst [vmem:[%s177 + $0x1c0] sm:$0xff] %v1184
      %1290 = vst [vmem:[%s177 + $0x1c8] sm:$0xff] %v1185
      %1291 = vst [vmem:[%s177 + $0x1d0] sm:$0xff] %v1186
      %1292 = vst [vmem:[%s177 + $0x1d8] sm:$0xff] %v1187
      %1293 = vst [vmem:[%s177 + $0x1e0] sm:$0xff] %v1188
      %1294 = vst [vmem:[%s177 + $0x1e8] sm:$0xff] %v1189
      %1295 = vst.msk [vmem:[%s177 + $0x1f0] sm:$0xff] %vm322, %v1190
      %1296 = vst [vmem:[%s177 + $0x1f8] sm:$0xff] %v1191
      %1297 = vst [vmem:[%s177 + $0x200] sm:$0xff] %v1192
      %1298 = vst [vmem:[%s177 + $0x208] sm:$0xff] %v1193
      %1299 = vst [vmem:[%s177 + $0x210] sm:$0xff] %v1194
      %1300 = vst [vmem:[%s177 + $0x218] sm:$0xff] %v1195
      %1301 = vst [vmem:[%s177 + $0x220] sm:$0xff] %v1196
      %1302 = vst.msk [vmem:[%s177 + $0x228] sm:$0xff] %vm322, %v1197
      %1303 = vst [vmem:[%s177 + $0x230] sm:$0xff] %v1198
      %1304 = vst [vmem:[%s177 + $0x238] sm:$0xff] %v1199
      %1305 = vst [vmem:[%s177 + $0x240] sm:$0xff] %v1200
      %1306 = vst [vmem:[%s177 + $0x248] sm:$0xff] %v1201
      %1307 = vst [vmem:[%s177 + $0x250] sm:$0xff] %v1202
      %1308 = vst [vmem:[%s177 + $0x258] sm:$0xff] %v1203
      %1309 = vst.msk [vmem:[%s177 + $0x260] sm:$0xff] %vm322, %v1204
      %1310 = vst [vmem:[%s177 + $0x268] sm:$0xff] %v1205
      %1311 = vst [vmem:[%s177 + $0x270] sm:$0xff] %v1206
      %1312 = vst [vmem:[%s177 + $0x278] sm:$0xff] %v1207
      %1313 = vst [vmem:[%s177 + $0x280] sm:$0xff] %v1208
      %1314 = vst [vmem:[%s177 + $0x288] sm:$0xff] %v1209
      %1315 = vst [vmem:[%s177 + $0x290] sm:$0xff] %v1210
      %1316 = vst.msk [vmem:[%s177 + $0x298] sm:$0xff] %vm322, %v1211
      %1317 = vst [vmem:[%s177 + $0x2a0] sm:$0xff] %v1212
      %1318 = vst [vmem:[%s177 + $0x2a8] sm:$0xff] %v1213
      %1319 = vst [vmem:[%s177 + $0x2b0] sm:$0xff] %v1214
      %1320 = vst [vmem:[%s177 + $0x2b8] sm:$0xff] %v1215
      %1321 = vst [vmem:[%s177 + $0x2c0] sm:$0xff] %v1216
      %1322 = vst [vmem:[%s177 + $0x2c8] sm:$0xff] %v1217
      %1323 = vst.msk [vmem:[%s177 + $0x2d0] sm:$0xff] %vm322, %v1218
      %1324 = vst [vmem:[%s177 + $0x2d8] sm:$0xff] %v1219
      %1325 = vst [vmem:[%s177 + $0x2e0] sm:$0xff] %v1220
      %1326 = vst [vmem:[%s177 + $0x2e8] sm:$0xff] %v1221
      %1327 = vst [vmem:[%s177 + $0x2f0] sm:$0xff] %v1222
      %1328 = vst [vmem:[%s177 + $0x2f8] sm:$0xff] %v1223
      %1329 = vst [vmem:[%s177 + $0x300] sm:$0xff] %v1224
      %1330 = vst.msk [vmem:[%s177 + $0x308] sm:$0xff] %vm322, %v1225
      %1331 = vst [vmem:[%s177 + $0x310] sm:$0xff] %v1226
      %1332 = vst [vmem:[%s177 + $0x318] sm:$0xff] %v1227
      %1333 = vst [vmem:[%s177 + $0x320] sm:$0xff] %v1228
      %1334 = vst [vmem:[%s177 + $0x328] sm:$0xff] %v1229
      %1335 = vst [vmem:[%s177 + $0x330] sm:$0xff] %v1230
      %1336 = vst [vmem:[%s177 + $0x338] sm:$0xff] %v1231
      %1337 = vst.msk [vmem:[%s177 + $0x340] sm:$0xff] %vm322, %v1232
      %s1338 = smul.u32 15, %s14
      %p1339 = scmp.lt.s32.totalorder %s1338, 29
      %s1340 = scalar_select %p1339, %s1338, 29
      %s1341 = smul.addr %s1340, 7
      %s1342 = smul.addr %s1341, 8
      %s1343 = scalar_lea.vmem %s3, %s1342
      // Predicated region
      $region33: #{tpu_custom_call.1} parent=31 // pred_check
        %p1344 = pneg %p100
      $region34: #{tpu_custom_call.1} parent=31 // pred_check_branch
        %1346 = sbr.rel (%p1344) target = $region36
      $region35: #{tpu_custom_call.1} parent=31 // pred_region
        %s1347 = smul.u32 15, %s14
      $region36: #{tpu_custom_call.1} parent=31 // pred_fallthru
        _
    $region32: #{tpu_custom_call.1} parent=5 // pred_fallthru
      _
    %p1348 = scmp.le.s32.totalorder 2, %s9
    // Predicated region
    $region37: #{tpu_custom_call.1} parent=5 // pred_check
      %p1349 = pneg %p1348
    $region38: #{tpu_custom_call.1} parent=5 // pred_check_branch
      %1351 = sbr.rel (%p1349) target = $region40
    $region39: #{tpu_custom_call.1} parent=5 // pred_region
      %s1352 = ssub.s32 %s9, 2
      // Predicated region
      $region41: #{tpu_custom_call.1} parent=39 // pred_check
        %p1353 = pneg %p106
      $region42: #{tpu_custom_call.1} parent=39 // pred_check_branch
        %1355 = sbr.rel (%p1353) target = $region44
      $region43: #{tpu_custom_call.1} parent=39 // pred_region
        %s1356 = smul.u32 15, %s15
        %p1357 = scmp.lt.s32.totalorder %s1356, 29
        %s1358 = scalar_select %p1357, %s1356, 29
        %s1359 = smul.addr %s1358, 7
        %s1360 = smul.addr %s1359, 8
        %s1361 = scalar_lea.vmem %s3, %s1360
      $region44: #{tpu_custom_call.1} parent=39 // pred_fallthru
        _
    $region40: #{tpu_custom_call.1} parent=5 // pred_fallthru
      _
  $region6: #{tpu_custom_call.1} parent=0 // loop_footer
    %s13 = sadd.s32 1, %s9
  $region7: #{tpu_custom_call.1} parent=0 // loop_footer_branch
    %8 = sbr.rel target = $region3
  $region8: #{tpu_custom_call.1} parent=0 // loop_exit
    _

</llo_original>
